<compile_context>
chip_gen: v7x
topology: tpu7x:2x2x1
jax: 0.10.0
libtpu: 0.0.40
codegen_flags: <defaults>
</compile_context>

<pallas_src>
import jax
import jax.numpy as jnp
from jax.experimental import pallas as pl
from jax.experimental.pallas import tpu as pltpu

_LANES = 128
_SUBLANES = 8


def _round_up(x: int, n: int) -> int:
    return ((x + n - 1) // n) * n


def _linear_kernel(x_ref, w_ref, b_ref, o_ref, *, compute_dtype):
    # x_ref: (tm, d_in)        input dtype (cast to compute dtype in-kernel)
    # w_ref: (d_in, d_out_pad) compute dtype   -- VMEM-resident across steps
    # b_ref: (1, d_out_pad)    f32             -- VMEM-resident across steps
    # o_ref: (tm, d_out_pad)   output dtype
    x = x_ref[...].astype(compute_dtype)
    acc = jnp.dot(x, w_ref[...], preferred_element_type=jnp.float32)
    o_ref[...] = (acc + b_ref[...]).astype(o_ref.dtype)


def prepare_params(weight, bias, compute_dtype=jnp.bfloat16):
    """One-time parameter preparation (call at init, NOT per forward pass).

    weight: [d_out, d_in] (PyTorch nn.Linear layout), bias: [d_out].
    Returns (w_prep [d_in, d_out_pad], b_prep [1, d_out_pad], d_out) with the
    output feature dim zero-padded to a multiple of 128 lanes and the weight
    pre-transposed so the forward never materializes weight.T in HBM.
    """
    d_out, d_in = weight.shape
    d_out_pad = _round_up(d_out, _LANES)
    w_prep = jnp.zeros((d_in, d_out_pad), compute_dtype)
    w_prep = w_prep.at[:, :d_out].set(weight.T.astype(compute_dtype))
    b_prep = jnp.zeros((1, d_out_pad), jnp.float32)
    b_prep = b_prep.at[:, :d_out].set(bias.astype(jnp.float32))
    return w_prep, b_prep, d_out


def input_encoder_forward(x, w_prep, b_prep, d_out, *, tm=512,
                          compute_dtype=jnp.bfloat16):
    """y = x @ W.T + b (== nn.Linear forward), x: [batch, seq, d_in]."""
    batch, seq, d_in = x.shape
    d_out_pad = w_prep.shape[1]
    assert w_prep.shape[0] == d_in
    m = batch * seq

    in_bytes = jnp.dtype(x.dtype).itemsize
    out_bytes = jnp.dtype(x.dtype).itemsize

    # Adaptive row tile: keep the double-buffered per-step working set
    # (x tile + out tile, 2 buffers each) under ~8 MiB so we stay far inside
    # the default scoped-VMEM limit even on v7x, while amortizing the ~600-cyc
    # per-grid-step overhead with the largest tile that fits.
    budget = 8 * 1024 * 1024
    per_row = 2 * (d_in * in_bytes + d_out_pad * out_bytes)
    tm = min(tm, max(_SUBLANES, budget // max(per_row, 1)))

    if m <= tm:
        tm = _round_up(m, _SUBLANES)
        m_pad = tm
    else:
        tm = _round_up(tm, _SUBLANES)
        m_pad = _round_up(m, tm)

    x2d = x.reshape(m, d_in)
    if m_pad != m:
        x2d = jnp.pad(x2d, ((0, m_pad - m), (0, 0)))

    grid = (m_pad // tm,)
    bytes_accessed = (
        m_pad * d_in * in_bytes
        + w_prep.size * w_prep.dtype.itemsize
        + b_prep.size * b_prep.dtype.itemsize
        + m_pad * d_out_pad * out_bytes
    )

    kernel = lambda xr, wr, br, orf: _linear_kernel(
        xr, wr, br, orf, compute_dtype=compute_dtype)

    out2d = pl.pallas_call(
        kernel,
        out_shape=jax.ShapeDtypeStruct((m_pad, d_out_pad), x.dtype),
        grid_spec=pltpu.PrefetchScalarGridSpec(
            num_scalar_prefetch=0,
            grid=grid,
            in_specs=[
                # Activation rows: new tile each step (double-buffered DMA).
                pl.BlockSpec((tm, d_in), lambda i: (i, 0)),
                # Weight & bias: constant index_map -> fetched once, resident.
                pl.BlockSpec((d_in, d_out_pad), lambda i: (0, 0)),
                pl.BlockSpec((1, d_out_pad), lambda i: (0, 0)),
            ],
            out_specs=pl.BlockSpec((tm, d_out_pad), lambda i: (i, 0)),
        ),
        compiler_params=pltpu.CompilerParams(
            # Independent row tiles: shard across both TensorCores on v7x.
            dimension_semantics=("parallel",),
        ),
        cost_estimate=pl.CostEstimate(
            flops=2 * m_pad * d_in * d_out_pad,
            transcendentals=0,
            bytes_accessed=bytes_accessed,
        ),
    )(x2d, w_prep, b_prep)

    # TODO(synk): for very large d_in (>~2-4K) add a trailing K grid axis with
    # an f32 VMEM accumulator (pl.when init/finalize) instead of keeping the
    # whole (d_in, d_out_pad) weight resident.
    return out2d[:m, :d_out].reshape(batch, seq, d_out)


def init_params(key, input_dim, output_dim):
    # Deterministic init mimicking nn.Linear default (uniform +/- 1/sqrt(fan_in)).
    kw, kb = jax.random.split(key)
    bound = 1.0 / jnp.sqrt(jnp.float32(input_dim))
    weight = jax.random.uniform(
        kw, (output_dim, input_dim), jnp.float32, minval=-bound, maxval=bound)
    bias = jax.random.uniform(
        kb, (output_dim,), jnp.float32, minval=-bound, maxval=bound)
    return weight, bias


if __name__ == "__main__":
    batch, seq = 2, 8
    input_dim, output_dim = 32, 64

    key = jax.random.PRNGKey(0)
    kx, kp = jax.random.split(key)

    x = jax.random.normal(kx, (batch, seq, input_dim), jnp.float32)
    weight, bias = init_params(kp, input_dim, output_dim)

    # One-time parameter prep (transpose + lane padding + bf16 cast).
    w_prep, b_prep, d_out = prepare_params(weight, bias)

    y = input_encoder_forward(x, w_prep, b_prep, d_out)
    y = jax.block_until_ready(y)
    assert y.shape == (batch, seq, output_dim)

    # Reference 1: identical bf16-input / f32-accumulate math in plain JAX.
    y_ref_bf16 = (
        jnp.dot(x.astype(jnp.bfloat16).reshape(-1, input_dim),
                weight.T.astype(jnp.bfloat16),
                preferred_element_type=jnp.float32)
        + bias
    ).reshape(batch, seq, output_dim)
    assert jnp.allclose(y, y_ref_bf16, atol=1e-3, rtol=1e-3)

    # Reference 2: full-f32 nn.Linear semantics (loose: bf16 rounding).
    y_ref_f32 = x @ weight.T + bias
    assert jnp.allclose(y, y_ref_f32, atol=3e-2, rtol=3e-2)

    # Reference 3: exact f32 path (compute_dtype=f32, no cast anywhere).
    w_prep32, b_prep32, _ = prepare_params(weight, bias, compute_dtype=jnp.float32)
    y32 = input_encoder_forward(x, w_prep32, b_prep32, d_out,
                                compute_dtype=jnp.float32)
    y32 = jax.block_until_ready(y32)
    assert jnp.allclose(y32, y_ref_f32, atol=1e-5, rtol=1e-5)

    print("KERNEL_OK")
</pallas_src>

<mosaic_0001>
module attributes {stable_mosaic.version = 11 : i64} {
  func.func @_lambda_(%arg0: i32, %arg1: memref<16x32xf32, #tpu.memory_space<vmem>>, %arg2: memref<32x128xbf16, #tpu.memory_space<vmem>>, %arg3: memref<1x128xf32, #tpu.memory_space<vmem>>, %arg4: memref<16x128xf32, #tpu.memory_space<vmem>>) attributes {dimension_semantics = [#tpu.dimension_semantics<parallel>], iteration_bounds = array<i64: 1>, scalar_prefetch = 0 : i64, scratch_operands = 0 : i64, tpu.core_type = #tpu.core_type<tc>, window_params = [{transform_indices = @transform_0, window_bounds = array<i64: 16, 32>}, {pipeline_mode = #tpu.pipeline_mode<synchronous>, transform_indices = @transform_1, window_bounds = array<i64: 32, 128>}, {pipeline_mode = #tpu.pipeline_mode<synchronous>, transform_indices = @transform_2, window_bounds = array<i64: 1, 128>}, {transform_indices = @transform_3, window_bounds = array<i64: 16, 128>}]} {
    %c0 = arith.constant 0 : index
    %c0_0 = arith.constant 0 : index
    %0 = vector.load %arg1[%c0, %c0_0] : memref<16x32xf32, #tpu.memory_space<vmem>>, vector<16x32xf32>
    %1 = arith.truncf %0 : vector<16x32xf32> to vector<16x32xbf16>
    %c0_1 = arith.constant 0 : index
    %c0_2 = arith.constant 0 : index
    %2 = vector.load %arg2[%c0_1, %c0_2] : memref<32x128xbf16, #tpu.memory_space<vmem>>, vector<32x128xbf16>
    %cst = arith.constant dense<0.000000e+00> : vector<16x128xf32>
    %3 = tpu.matmul %1, %2, %cst {dimension_numbers = #tpu.dot_dimension_numbers<[1], [0], [0], [1], [0, 0, 1, 1], [], []>} : vector<16x32xbf16>, vector<32x128xbf16>, vector<16x128xf32> -> vector<16x128xf32>
    %c0_3 = arith.constant 0 : index
    %c0_4 = arith.constant 0 : index
    %4 = vector.load %arg3[%c0_3, %c0_4] : memref<1x128xf32, #tpu.memory_space<vmem>>, vector<1x128xf32>
    %5 = vector.broadcast %4 : vector<1x128xf32> to vector<16x128xf32>
    %6 = arith.addf %3, %5 : vector<16x128xf32>
    %c0_5 = arith.constant 0 : index
    %c0_6 = arith.constant 0 : index
    %7 = vector.load %arg4[%c0_5, %c0_6] : memref<16x128xf32, #tpu.memory_space<vmem>>, vector<16x128xf32>
    tpu.vector_store %arg4[%c0_5, %c0_6], %6 {strides = array<i32>} : memref<16x128xf32, #tpu.memory_space<vmem>>, vector<16x128xf32>,
    return
  }
  func.func @transform_0(%arg0: i32) -> (i32, i32) {
    %c0_i32 = arith.constant 0 : i32
    %c0_i32_0 = arith.constant 0 : i32
    return %arg0, %c0_i32 : i32, i32
  }
  func.func @transform_1(%arg0: i32) -> (i32, i32) {
    %c0_i32 = arith.constant 0 : i32
    %c0_i32_0 = arith.constant 0 : i32
    %c0_i32_1 = arith.constant 0 : i32
    return %c0_i32, %c0_i32_0 : i32, i32
  }
  func.func @transform_2(%arg0: i32) -> (i32, i32) {
    %c0_i32 = arith.constant 0 : i32
    %c0_i32_0 = arith.constant 0 : i32
    %c0_i32_1 = arith.constant 0 : i32
    return %c0_i32, %c0_i32_0 : i32, i32
  }
  func.func @transform_3(%arg0: i32) -> (i32, i32) {
    %c0_i32 = arith.constant 0 : i32
    %c0_i32_0 = arith.constant 0 : i32
    return %arg0, %c0_i32 : i32, i32
  }
}

</mosaic_0001>

<llo_original>
// kernel: tpu_custom_call.1
$region0: #{tpu_custom_call.1}
  #allocation0 [shape = 'u32[]', space=smem, size = 0x4, offset = 0x4, fixed_abs, tag = 'smem constant byte address 0x4 - core index']
  #allocation1 [shape = 'u32[144,128]{1,0:T(1,128)}', space=vmem, size = 0x12000, scoped, tag = 'internal scratch']
  %s0 = inlined_call_operand.hbm [shape: f32[16,32], index: 0, kind: input, shape index: {}]
  %s1 = inlined_call_operand.hbm [shape: bf16[32,128], index: 1, kind: input, shape index: {}]
  %s2 = inlined_call_operand.vmem [shape: f32[1,128], index: 2, kind: input, shape index: {}]
  %s3 = inlined_call_operand.hbm [shape: f32[16,128], index: 3, kind: output, shape index: {}]
  %s4 = sld [smem:[#allocation0]]
  $region30: #{tpu_custom_call.1} parent=0
    _
  %s6 = ssub.s32 1, %s4
  %s7 = scalar_select 0, %s6, %s4
  $region1: #{tpu_custom_call.1} parent=0
    #allocation2 [shape = 'u8[8192]{0}', space=vmem, size = 0x2000, scoped, tag = 'input window, operand 0, single buffered']
    #allocation3 [shape = 's32[1]{0}', space=sflag, size = 0x4, scoped, tag = 'scoped memory for tpu_custom_call.1']
    #allocation4 [shape = 's32[1]{0}', space=sflag, size = 0x4, scoped, tag = 'scoped memory for tpu_custom_call.1']
    #allocation5 [shape = 'u8[8192]{0}', space=vmem, size = 0x2000, scoped, tag = 'input window, operand 1, single buffered']
    #allocation6 [shape = 's32[1]{0}', space=sflag, size = 0x4, scoped, tag = 'scoped memory for tpu_custom_call.1']
    #allocation7 [shape = 'u8[8192]{0}', space=vmem, size = 0x2000, scoped, tag = 'output window, operand 0, single buffered']
    %8 = vsyncpa [#allocation3], 0
    %9 = vsyncpa [#allocation6], 0
    %10 = vsyncpa [#allocation4], 0
    // Predicated region
    $region2: #{tpu_custom_call.1} parent=1 // pred_check
      _
    $region3: #{tpu_custom_call.1} parent=1 // pred_check_branch
      %12 = sbr.rel (0) target = $region5
    $region4: #{tpu_custom_call.1} parent=1 // pred_region
      %s14 = ssub.s32 256, 256
      %15 = vsyncadd [#allocation3], %s14
      %s16 = sshll.u32 [#allocation2], 4
      %s17 = int_to_ptr.vmem [resolvable:$true] %s16
      %22 = dma.hbm_to_vmem [thread:$0]  %s0, 256, %s17, [#allocation3], 128, 128, 8
    $region5: #{tpu_custom_call.1} parent=1 // pred_fallthru
      _
    // Predicated region
    $region6: #{tpu_custom_call.1} parent=1 // pred_check
      _
    $region7: #{tpu_custom_call.1} parent=1 // pred_check_branch
      %24 = sbr.rel (0) target = $region9
    $region8: #{tpu_custom_call.1} parent=1 // pred_region
      %s26 = ssub.s32 256, 256
      %27 = vsyncadd [#allocation6], %s26
      %s28 = sshll.u32 [#allocation5], 4
      %s29 = int_to_ptr.vmem [resolvable:$true] %s28
      %34 = dma.hbm_to_vmem [thread:$0]  %s1, 256, %s29, [#allocation6], 64, 64, 4
    $region9: #{tpu_custom_call.1} parent=1 // pred_fallthru
      _
    // Predicated region
    $region10: #{tpu_custom_call.1} parent=1 // pred_check
      _
    $region11: #{tpu_custom_call.1} parent=1 // pred_check_branch
      %36 = sbr.rel (0) target = $region13
    $region12: #{tpu_custom_call.1} parent=1 // pred_region
      _
    $region13: #{tpu_custom_call.1} parent=1 // pred_fallthru
      _
    // Predicated region
    $region14: #{tpu_custom_call.1} parent=1 // pred_check
      _
    $region15: #{tpu_custom_call.1} parent=1 // pred_check_branch
      %38 = sbr.rel (0) target = $region17
    $region16: #{tpu_custom_call.1} parent=1 // pred_region
      %39 = dma.done [#allocation3], 256
    $region17: #{tpu_custom_call.1} parent=1 // pred_fallthru
      _
    // Predicated region
    $region18: #{tpu_custom_call.1} parent=1 // pred_check
      _
    $region19: #{tpu_custom_call.1} parent=1 // pred_check_branch
      %41 = sbr.rel (0) target = $region21
    $region20: #{tpu_custom_call.1} parent=1 // pred_region
      %42 = dma.done [#allocation6], 256
    $region21: #{tpu_custom_call.1} parent=1 // pred_fallthru
      _
    %v44 = vld [vmem:[#allocation2] sm:$0xff]
    %v45 = vld [vmem:[#allocation2 + $0x8] sm:$0xff]
    %v46 = vpack.c.bf16 %v45, %v44
    %v47 = vld [vmem:[#allocation5] sm:$0xf]
    %v48 = vld [vmem:[#allocation5 + $0x4] sm:$0xf]
    %v49 = vld [vmem:[#allocation5 + $0x8] sm:$0xf]
    %v50 = vld [vmem:[#allocation5 + $0xc] sm:$0xf]
    %v51 = vld [vmem:[%s2] sm:$0x1]
    %v53 = vlaneseq
    %v54 = vshrl.u32 %v53, 7
    %v55 = vsub.s32 0, %v54
    %v56 = vrot.slane %v51, %v55
    %v62 = vunpack.c.l.b16 %v47
    %v63 = vunpack.c.l.b16 %v48
    %v64 = vunpack.c.l.b16 %v49
    %v65 = vunpack.c.l.b16 %v50
    %v66 = vpack.c.b16 %v63, %v62
    %v67 = vpack.c.b16 %v65, %v64
    %vm70 = vcmask 261120
    %v72 = vsel %vm70, %v46, 0
    %74 = vmatprep.subr.bf16.mxu0 0
    %75 = vmatpush1.bf16.msra.mxu0 %v66
    %76 = vmatprep.subr.bf16.mxu0 0
    %77 = vmatpush1.bf16.msra.mxu0 %v67
    %78 = vmatprep.subr.bf16.mxu0 0
    %79 = vmatpush1.bf16.msra.mxu0 0
    %80 = vmatprep.subr.bf16.mxu0 0
    %81 = vmatpush1.bf16.msra.mxu0 0
    %82 = vmatprep.subr.bf16.mxu0 0
    %83 = vmatpush1.bf16.msra.mxu0 0
    %84 = vmatprep.subr.bf16.mxu0 0
    %85 = vmatpush1.bf16.msra.mxu0 0
    %86 = vmatprep.subr.bf16.mxu0 0
    %87 = vmatpush1.bf16.msra.mxu0 0
    %88 = vmatprep.subr.bf16.mxu0 0
    %89 = vmatpush1.bf16.msra.mxu0 0
    %90 = vmatprep.subr.bf16.mxu0 0
    %91 = vmatpush1.bf16.msra.mxu0 0
    %92 = vmatprep.subr.bf16.mxu0 0
    %93 = vmatpush1.bf16.msra.mxu0 0
    %94 = vmatprep.subr.bf16.mxu0 0
    %95 = vmatpush1.bf16.msra.mxu0 0
    %96 = vmatprep.subr.bf16.mxu0 0
    %97 = vmatpush1.bf16.msra.mxu0 0
    %98 = vmatprep.subr.bf16.mxu0 0
    %99 = vmatpush1.bf16.msra.mxu0 0
    %100 = vmatprep.subr.bf16.mxu0 0
    %101 = vmatpush1.bf16.msra.mxu0 0
    %102 = vmatprep.subr.bf16.mxu0 0
    %103 = vmatpush1.bf16.msra.mxu0 0
    %104 = vmatprep.subr.bf16.mxu0 0
    %105 = vmatpush1.bf16.msra.mxu0 0
    %106 = vmatprep.mubr.bf16.mxu0 0
    %107 = vmatmul.mubr.bf16.gmra.mrb[0].mxu0 %v72
    %v108 = vpop.f32.mrb[0].mxu0
    %v109 = vadd.f32 %v56, %v108
    %v110 = vpop.f32.mrb[0].mxu0
    %v111 = vpop.f32.mrb[0].mxu0
    %v112 = vadd.f32 %v56, %v111
    %v113 = vpop.f32.mrb[0].mxu0
    %114 = vdwg.mxu0
    %115 = vst [vmem:[#allocation7] sm:$0xff] %v109
    %116 = vst [vmem:[#allocation7 + $0x8] sm:$0xff] %v112
    // Predicated region
    $region22: #{tpu_custom_call.1} parent=1 // pred_check
      _
    $region23: #{tpu_custom_call.1} parent=1 // pred_check_branch
      %118 = sbr.rel (0) target = $region25
    $region24: #{tpu_custom_call.1} parent=1 // pred_region
      %s120 = ssub.s32 256, 256
      %121 = vsyncadd [#allocation4], %s120
      %s122 = sshll.u32 [#allocation7], 4
      %s123 = int_to_ptr.vmem [resolvable:$true] %s122
      %128 = dma.vmem_to_hbm [thread:$0]  %s123, 256, %s3, [#allocation4], 128, 128, 8
    $region25: #{tpu_custom_call.1} parent=1 // pred_fallthru
      _
    // Predicated region
    $region26: #{tpu_custom_call.1} parent=1 // pred_check
      _
    $region27: #{tpu_custom_call.1} parent=1 // pred_check_branch
      %130 = sbr.rel (0) target = $region29
    $region28: #{tpu_custom_call.1} parent=1 // pred_region
      %131 = dma.done [#allocation4], 256
    $region29: #{tpu_custom_call.1} parent=1 // pred_fallthru
      _
    %132 = vsyncpa [#allocation3], 1
    %133 = vsyncpa [#allocation6], 1
    %134 = vsyncpa [#allocation4], 1

</llo_original>
